<compile_context>
chip_gen: v7x
topology: tpu7x:2x2x1
jax: 0.10.0
libtpu: 0.0.40
codegen_flags: <defaults>
</compile_context>

<pallas_src>
import functools

import jax
import jax.numpy as jnp
from jax import lax
from jax.experimental import pallas as pl
from jax.experimental.pallas import tpu as pltpu


def _cdiv(a, b):
    return (a + b - 1) // b


def _round_up(x, m):
    return ((x + m - 1) // m) * m


def _tpu_params():
    """(num_core_splits, tile_budget_bytes, vmem_limit_bytes) from device kind."""
    kind = ""
    try:
        kind = jax.devices()[0].device_kind.lower()
    except Exception:
        pass
    # 2-way "parallel" split only on chips exposing 2 TensorCores to one kernel.
    multi_core = any(t in kind for t in ("v7", "v4", "v5p"))
    num_splits = 2 if multi_core else 1
    # v7x has 64 MiB VMEM per TensorCore; v4 / v5e / v5p / v6e have 128 MiB.
    small_vmem = ("v7" in kind) or (kind == "")
    if small_vmem:
        tile_budget = 28 * 1024 * 1024
        vmem_limit = 48 * 1024 * 1024
    else:
        tile_budget = 64 * 1024 * 1024
        vmem_limit = 96 * 1024 * 1024
    return num_splits, tile_budget, vmem_limit


def _pick_row_tile(n_rows, d, isx, isz, num_splits, tile_budget):
    """Largest row tile whose double-buffered inputs + in-kernel f32 temporaries
    fit the VMEM budget, with each single input DMA buffer capped at ~4 MiB."""
    sublane = {4: 8, 2: 16, 1: 32}.get(min(isx, isz), 32)
    # Per-row VMEM bytes:
    #   x, z double-buffered in native dtype               -> 2*isx*d + 2*isz*d
    #   ~5 live full-tile f32 temporaries (casts/bce/...)  -> 20*d
    #   (row_tile, 1) mask block is lane-padded in VMEM    -> ~512 B/row, x2 bufs
    per_row = d * (2 * isx + 2 * isz + 20) + 1024 + 8
    rt = tile_budget // per_row
    # keep each single input buffer DMA at <= ~4 MiB (plenty to hide per-step
    # overhead) regardless of D
    rt = min(rt, (4 * 1024 * 1024) // max(d * max(isx, isz), 1))
    per_core_rows = _round_up(_cdiv(n_rows, num_splits), sublane)
    rt = min(rt, per_core_rows)
    rt = max((rt // sublane) * sublane, sublane)
    return rt


def _lm_criterion_kernel(x_ref, t_ref, m_ref, out_ref, acc_ref, *,
                         row_tile, d, n_rows, tiles_per_core):
    c = pl.program_id(0)   # core split (parallel)
    i = pl.program_id(1)   # row-tile index within this split (arbitrary)

    @pl.when(i == 0)
    def _():
        acc_ref[...] = jnp.zeros_like(acc_ref)

    row_start = (c * tiles_per_core + i) * row_tile

    # Fully out-of-range clamped tiles (grid padding) skip all compute.
    @pl.when(row_start < n_rows)
    def _():
        x = x_ref[...].astype(jnp.float32)   # (row_tile, D) logits
        z = t_ref[...].astype(jnp.float32)   # (row_tile, D) targets
        m = m_ref[...].astype(jnp.float32)   # (row_tile, 1) mask
        # numerically stable binary_cross_entropy_with_logits, reduction='none':
        #   max(x, 0) - x*z + log(1 + exp(-|x|))
        bce = jnp.maximum(x, 0.0) - x * z + jnp.log1p(jnp.exp(-jnp.abs(x)))
        contrib = bce * m                    # (row_tile, D)

        is_full = (row_start + row_tile) <= n_rows

        @pl.when(is_full)                    # hot path: no per-element select
        def _():
            acc_ref[...] += jnp.sum(
                contrib.reshape(row_tile // 8, 8, d), axis=0)

        @pl.when(jnp.logical_not(is_full))   # at most one partial tile per core
        def _():
            row_ids = row_start + lax.broadcasted_iota(
                jnp.int32, (row_tile, 1), 0)
            safe = jnp.where(row_ids < n_rows, contrib, 0.0)
            acc_ref[...] += jnp.sum(
                safe.reshape(row_tile // 8, 8, d), axis=0)

    @pl.when(i == pl.num_programs(1) - 1)
    def _():
        out_ref[0, 0] = jnp.sum(acc_ref[...])


def language_model_criterion(inp, target, mask):
    """Pallas equivalent of LanguageModelCriterion.forward."""
    B, T, D = inp.shape
    target = target[:, :T]
    mask = mask[:, :T].astype(jnp.float32)

    n_rows = B * T
    x = inp.reshape(n_rows, D)        # native dtype, no upcast copy
    z = target.reshape(n_rows, D)     # native dtype, no upcast copy
    m = mask.reshape(n_rows, 1)

    num_splits, tile_budget, vmem_limit = _tpu_params()
    isx = jnp.dtype(inp.dtype).itemsize
    isz = jnp.dtype(target.dtype).itemsize
    row_tile = _pick_row_tile(n_rows, D, isx, isz, num_splits, tile_budget)
    n_tiles = _cdiv(n_rows, row_tile)
    tiles_per_core = _cdiv(n_tiles, num_splits)

    def row_block(c, i):
        # clamp so fully-out-of-range tiles re-read a valid tile
        # (their compute is skipped inside the kernel)
        return (jnp.minimum(c * tiles_per_core + i, n_tiles - 1), 0)

    kernel = functools.partial(
        _lm_criterion_kernel,
        row_tile=row_tile, d=D, n_rows=n_rows, tiles_per_core=tiles_per_core)

    partials = pl.pallas_call(
        kernel,
        out_shape=jax.ShapeDtypeStruct((num_splits, 1), jnp.float32),
        grid_spec=pltpu.PrefetchScalarGridSpec(
            num_scalar_prefetch=0,
            grid=(num_splits, tiles_per_core),
            in_specs=[
                pl.BlockSpec((row_tile, D), row_block),
                pl.BlockSpec((row_tile, D), row_block),
                pl.BlockSpec((row_tile, 1), row_block),
            ],
            out_specs=pl.BlockSpec((1, 1), lambda c, i: (c, 0),
                                   memory_space=pltpu.SMEM),
            scratch_shapes=[pltpu.VMEM((8, D), jnp.float32)],
        ),
        compiler_params=pltpu.CompilerParams(
            dimension_semantics=("parallel", "arbitrary"),
            vmem_limit_bytes=vmem_limit,
        ),
    )(x, z, m)

    loss_sum = jnp.sum(partials)
    mask_sum = jnp.sum(mask)   # tiny (B*T floats): trivial glue in plain JAX
    return loss_sum / mask_sum


def _reference(inp, target, mask):
    """Pure-JAX reference matching the PyTorch module."""
    T = inp.shape[1]
    target = target[:, :T]
    mask = mask[:, :T].astype(jnp.float32)
    x = inp.astype(jnp.float32)
    z = target.astype(jnp.float32)
    bce = jnp.maximum(x, 0.0) - x * z + jnp.log1p(jnp.exp(-jnp.abs(x)))
    out = bce * mask[..., None]
    return jnp.sum(out) / jnp.sum(mask)


if __name__ == "__main__":
    key = jax.random.PRNGKey(0)
    k1, k2, k3 = jax.random.split(key, 3)

    # main case: target/mask longer than input in time, as in the module spec
    B, T, Ttgt, D = 2, 8, 10, 32
    inp = jax.random.normal(k1, (B, T, D), dtype=jnp.float32)
    target = jax.random.bernoulli(k2, 0.5, (B, Ttgt, D)).astype(jnp.float32)
    mask = jax.random.bernoulli(k3, 0.7, (B, Ttgt)).astype(jnp.float32)
    mask = mask.at[:, 0].set(1.0)   # avoid 0/0 in the demo

    out = jax.block_until_ready(language_model_criterion(inp, target, mask))
    ref = _reference(inp, target, mask)
    assert jnp.allclose(out, ref, rtol=1e-5, atol=1e-5), (out, ref)

    # second case: B*T not divisible by the row tile (exercises tail masking)
    k4, k5, k6 = jax.random.split(jax.random.PRNGKey(1), 3)
    B2, T2, Tt2, D2 = 2, 5, 7, 40
    inp2 = jax.random.normal(k4, (B2, T2, D2), dtype=jnp.float32)
    target2 = jax.random.bernoulli(k5, 0.5, (B2, Tt2, D2)).astype(jnp.float32)
    mask2 = jax.random.bernoulli(k6, 0.7, (B2, Tt2)).astype(jnp.float32)
    mask2 = mask2.at[:, 0].set(1.0)

    out2 = jax.block_until_ready(language_model_criterion(inp2, target2, mask2))
    ref2 = _reference(inp2, target2, mask2)
    assert jnp.allclose(out2, ref2, rtol=1e-5, atol=1e-5), (out2, ref2)

    # third case: bf16 logits (native-dtype streaming + in-kernel f32 cast)
    k7, k8, k9 = jax.random.split(jax.random.PRNGKey(2), 3)
    B3, T3, Tt3, D3 = 2, 6, 9, 48
    inp3 = jax.random.normal(k7, (B3, T3, D3), dtype=jnp.bfloat16)
    target3 = jax.random.bernoulli(k8, 0.5, (B3, Tt3, D3)).astype(jnp.float32)
    mask3 = jax.random.bernoulli(k9, 0.7, (B3, Tt3)).astype(jnp.float32)
    mask3 = mask3.at[:, 0].set(1.0)

    out3 = jax.block_until_ready(language_model_criterion(inp3, target3, mask3))
    ref3 = _reference(inp3, target3, mask3)
    assert jnp.allclose(out3, ref3, rtol=1e-4, atol=1e-4), (out3, ref3)

    print("KERNEL_OK")
</pallas_src>

<mosaic_0001>
module attributes {stable_mosaic.version = 11 : i64} {
  func.func @_lm_criterion_kernel(%arg0: i32, %arg1: i32, %arg2: memref<16x32xf32, #tpu.memory_space<vmem>>, %arg3: memref<16x32xf32, #tpu.memory_space<vmem>>, %arg4: memref<16x1xf32, #tpu.memory_space<vmem>>, %arg5: memref<1x1xf32, #tpu.memory_space<smem>>, %arg6: memref<8x32xf32, #tpu.memory_space<vmem>>) attributes {dimension_semantics = [#tpu.dimension_semantics<parallel>, #tpu.dimension_semantics<arbitrary>], iteration_bounds = array<i64: 1, 1>, scalar_prefetch = 0 : i64, scratch_operands = 1 : i64, tpu.core_type = #tpu.core_type<tc>, window_params = [{transform_indices = @transform_0, window_bounds = array<i64: 16, 32>}, {transform_indices = @transform_1, window_bounds = array<i64: 16, 32>}, {transform_indices = @transform_2, window_bounds = array<i64: 16, 1>}, {transform_indices = @transform_3, window_bounds = array<i64: 1, 1>}]} {
    %c0_i32 = arith.constant 0 : i32
    %0 = arith.cmpi eq, %arg1, %c0_i32 : i32
    %1 = arith.extui %0 : i1 to i32
    %c0_i32_0 = arith.constant 0 : i32
    %2 = arith.cmpi ne, %1, %c0_i32_0 : i32
    scf.if %2 {
      %cst = arith.constant 0.000000e+00 : f32
      %12 = vector.broadcast %cst : f32 to vector<8x32xf32>
      %c0 = arith.constant 0 : index
      %c0_5 = arith.constant 0 : index
      %13 = vector.load %arg6[%c0, %c0_5] : memref<8x32xf32, #tpu.memory_space<vmem>>, vector<8x32xf32>
      tpu.vector_store %arg6[%c0, %c0_5], %12 {strides = array<i32>} : memref<8x32xf32, #tpu.memory_space<vmem>>, vector<8x32xf32>,
    } else {
    }
    %c1_i32 = arith.constant 1 : i32
    %3 = arith.muli %arg0, %c1_i32 : i32
    %4 = arith.addi %3, %arg1 : i32
    %c16_i32 = arith.constant 16 : i32
    %5 = arith.muli %4, %c16_i32 : i32
    %c16_i32_1 = arith.constant 16 : i32
    %6 = arith.cmpi slt, %5, %c16_i32_1 : i32
    %7 = arith.extui %6 : i1 to i32
    %c0_i32_2 = arith.constant 0 : i32
    %8 = arith.cmpi ne, %7, %c0_i32_2 : i32
    scf.if %8 {
      %c0 = arith.constant 0 : index
      %c0_5 = arith.constant 0 : index
      %12 = vector.load %arg2[%c0, %c0_5] : memref<16x32xf32, #tpu.memory_space<vmem>>, vector<16x32xf32>
      %c0_6 = arith.constant 0 : index
      %c0_7 = arith.constant 0 : index
      %13 = vector.load %arg3[%c0_6, %c0_7] : memref<16x32xf32, #tpu.memory_space<vmem>>, vector<16x32xf32>
      %c0_8 = arith.constant 0 : index
      %c0_9 = arith.constant 0 : index
      %14 = vector.load %arg4[%c0_8, %c0_9] : memref<16x1xf32, #tpu.memory_space<vmem>>, vector<16x1xf32>
      %cst = arith.constant 0.000000e+00 : f32
      %15 = vector.broadcast %cst : f32 to vector<16x32xf32>
      %16 = arith.maximumf %12, %15 : vector<16x32xf32>
      %17 = arith.mulf %12, %13 : vector<16x32xf32>
      %18 = arith.subf %16, %17 : vector<16x32xf32>
      %19 = math.absf %12 : vector<16x32xf32>
      %cst_10 = arith.constant 0.000000e+00 : f32
      %20 = vector.broadcast %cst_10 : f32 to vector<16x32xf32>
      %21 = arith.subf %20, %19 : vector<16x32xf32>
      %22 = math.exp %21 : vector<16x32xf32>
      %23 = math.log1p %22 : vector<16x32xf32>
      %24 = arith.addf %18, %23 : vector<16x32xf32>
      %25 = vector.broadcast %14 : vector<16x1xf32> to vector<16x32xf32>
      %26 = arith.mulf %24, %25 : vector<16x32xf32>
      %c16_i32_11 = arith.constant 16 : i32
      %27 = arith.addi %5, %c16_i32_11 : i32
      %c16_i32_12 = arith.constant 16 : i32
      %28 = arith.cmpi sle, %27, %c16_i32_12 : i32
      %29 = arith.extui %28 : i1 to i32
      %c0_i32_13 = arith.constant 0 : i32
      %30 = arith.cmpi ne, %29, %c0_i32_13 : i32
      scf.if %30 {
        %c0_15 = arith.constant 0 : index
        %c0_16 = arith.constant 0 : index
        %34 = vector.load %arg6[%c0_15, %c0_16] : memref<8x32xf32, #tpu.memory_space<vmem>>, vector<8x32xf32>
        %35 = vector.shape_cast %26 : vector<16x32xf32> to vector<2x8x32xf32>
        %cst_17 = arith.constant dense<0.000000e+00> : vector<8x32xf32>
        %36 = vector.multi_reduction <add>, %35, %cst_17 [0] : vector<2x8x32xf32> to vector<8x32xf32>
        %37 = arith.addf %34, %36 : vector<8x32xf32>
        %c0_18 = arith.constant 0 : index
        %c0_19 = arith.constant 0 : index
        %38 = vector.load %arg6[%c0_18, %c0_19] : memref<8x32xf32, #tpu.memory_space<vmem>>, vector<8x32xf32>
        tpu.vector_store %arg6[%c0_18, %c0_19], %37 {strides = array<i32>} : memref<8x32xf32, #tpu.memory_space<vmem>>, vector<8x32xf32>,
      } else {
      }
      %true = arith.constant true
      %31 = arith.xori %28, %true : i1
      %32 = arith.extui %31 : i1 to i32
      %c0_i32_14 = arith.constant 0 : i32
      %33 = arith.cmpi ne, %32, %c0_i32_14 : i32
      scf.if %33 {
        %34 = tpu.iota {dimensions = array<i32: 0>} : vector<16x1xi32>
        %35 = vector.broadcast %5 : i32 to vector<16x1xi32>
        %36 = arith.addi %35, %34 : vector<16x1xi32>
        %c16_i32_15 = arith.constant 16 : i32
        %37 = vector.broadcast %c16_i32_15 : i32 to vector<16x1xi32>
        %38 = arith.cmpi slt, %36, %37 : vector<16x1xi32>
        %cst_16 = arith.constant 0.000000e+00 : f32
        %39 = vector.shape_cast %38 : vector<16x1xi1> to vector<16x1xi1>
        %40 = vector.broadcast %39 : vector<16x1xi1> to vector<16x32xi1>
        %41 = vector.broadcast %cst_16 : f32 to vector<16x32xf32>
        %42 = arith.select %40, %26, %41 : vector<16x32xi1>, vector<16x32xf32>
        %c0_17 = arith.constant 0 : index
        %c0_18 = arith.constant 0 : index
        %43 = vector.load %arg6[%c0_17, %c0_18] : memref<8x32xf32, #tpu.memory_space<vmem>>, vector<8x32xf32>
        %44 = vector.shape_cast %42 : vector<16x32xf32> to vector<2x8x32xf32>
        %cst_19 = arith.constant dense<0.000000e+00> : vector<8x32xf32>
        %45 = vector.multi_reduction <add>, %44, %cst_19 [0] : vector<2x8x32xf32> to vector<8x32xf32>
        %46 = arith.addf %43, %45 : vector<8x32xf32>
        %c0_20 = arith.constant 0 : index
        %c0_21 = arith.constant 0 : index
        %47 = vector.load %arg6[%c0_20, %c0_21] : memref<8x32xf32, #tpu.memory_space<vmem>>, vector<8x32xf32>
        tpu.vector_store %arg6[%c0_20, %c0_21], %46 {strides = array<i32>} : memref<8x32xf32, #tpu.memory_space<vmem>>, vector<8x32xf32>,
      } else {
      }
    } else {
    }
    %c0_i32_3 = arith.constant 0 : i32
    %9 = arith.cmpi eq, %arg1, %c0_i32_3 : i32
    %10 = arith.extui %9 : i1 to i32
    %c0_i32_4 = arith.constant 0 : i32
    %11 = arith.cmpi ne, %10, %c0_i32_4 : i32
    scf.if %11 {
      %c0 = arith.constant 0 : index
      %c0_5 = arith.constant 0 : index
      %12 = vector.load %arg6[%c0, %c0_5] : memref<8x32xf32, #tpu.memory_space<vmem>>, vector<8x32xf32>
      %13 = vector.shape_cast %12 : vector<8x32xf32> to vector<1x8x32xf32>
      %cst = arith.constant dense<0.000000e+00> : vector<1xf32>
      %14 = vector.multi_reduction <add>, %13, %cst [1, 2] : vector<1x8x32xf32> to vector<1xf32>
      %15 = vector.shape_cast %14 : vector<1xf32> to vector<1x1x1xf32>
      %16 = vector.extract %15[0, 0, 0] : f32 from vector<1x1x1xf32>
      %c0_6 = arith.constant 0 : index
      %c0_7 = arith.constant 0 : index
      %17 = memref.load %arg5[%c0_6, %c0_7] : memref<1x1xf32, #tpu.memory_space<smem>>
      memref.store %16, %arg5[%c0_6, %c0_7] : memref<1x1xf32, #tpu.memory_space<smem>>
    } else {
    }
    return
  }
  func.func @transform_0(%arg0: i32, %arg1: i32) -> (i32, i32) {
    %c1_i32 = arith.constant 1 : i32
    %0 = arith.muli %arg0, %c1_i32 : i32
    %1 = arith.addi %0, %arg1 : i32
    %c0_i32 = arith.constant 0 : i32
    %2 = arith.minsi %1, %c0_i32 : i32
    %c0_i32_0 = arith.constant 0 : i32
    %c0_i32_1 = arith.constant 0 : i32
    return %2, %c0_i32_0 : i32, i32
  }
  func.func @transform_1(%arg0: i32, %arg1: i32) -> (i32, i32) {
    %c1_i32 = arith.constant 1 : i32
    %0 = arith.muli %arg0, %c1_i32 : i32
    %1 = arith.addi %0, %arg1 : i32
    %c0_i32 = arith.constant 0 : i32
    %2 = arith.minsi %1, %c0_i32 : i32
    %c0_i32_0 = arith.constant 0 : i32
    %c0_i32_1 = arith.constant 0 : i32
    return %2, %c0_i32_0 : i32, i32
  }
  func.func @transform_2(%arg0: i32, %arg1: i32) -> (i32, i32) {
    %c1_i32 = arith.constant 1 : i32
    %0 = arith.muli %arg0, %c1_i32 : i32
    %1 = arith.addi %0, %arg1 : i32
    %c0_i32 = arith.constant 0 : i32
    %2 = arith.minsi %1, %c0_i32 : i32
    %c0_i32_0 = arith.constant 0 : i32
    %c0_i32_1 = arith.constant 0 : i32
    return %2, %c0_i32_0 : i32, i32
  }
  func.func @transform_3(%arg0: i32, %arg1: i32) -> (i32, i32) {
    %c0_i32 = arith.constant 0 : i32
    %c0_i32_0 = arith.constant 0 : i32
    return %arg0, %c0_i32 : i32, i32
  }
}

</mosaic_0001>

<llo_original>
// kernel: tpu_custom_call.1
$region0: #{tpu_custom_call.1}
  #allocation0 [shape = 'u32[]', space=smem, size = 0x4, offset = 0x4, fixed_abs, tag = 'smem constant byte address 0x4 - core index']
  #allocation1 [shape = 'u32[144,128]{1,0:T(1,128)}', space=vmem, size = 0x12000, scoped, tag = 'internal scratch']
  #allocation2 [shape = 'f32[8,32]{1,0:T(8,128)}', space=vmem, size = 0x1000, scoped, tag = 'scratch operand']
  %s0 = inlined_call_operand.hbm [shape: f32[16,32], index: 0, kind: input, shape index: {}]
  %s1 = inlined_call_operand.hbm [shape: f32[16,32], index: 1, kind: input, shape index: {}]
  %s2 = inlined_call_operand.hbm [shape: f32[16,1], index: 2, kind: input, shape index: {}]
  %s3 = inlined_call_operand.hbm [shape: f32[1,1], index: 3, kind: output, shape index: {}]
  %s4 = sld [smem:[#allocation0]]
  $region54: #{tpu_custom_call.1} parent=0
    _
  %s6 = ssub.s32 1, %s4
  %s7 = scalar_select 0, %s6, %s4
  $region1: #{tpu_custom_call.1} parent=0
    #allocation3 [shape = 'u8[8192]{0}', space=vmem, size = 0x2000, scoped, tag = 'input window, operand 0, single buffered']
    #allocation4 [shape = 's32[1]{0}', space=sflag, size = 0x4, scoped, tag = 'scoped memory for tpu_custom_call.1']
    #allocation5 [shape = 's32[1]{0}', space=sflag, size = 0x4, scoped, tag = 'scoped memory for tpu_custom_call.1']
    #allocation6 [shape = 'u8[8192]{0}', space=vmem, size = 0x2000, scoped, tag = 'input window, operand 1, single buffered']
    #allocation7 [shape = 's32[1]{0}', space=sflag, size = 0x4, scoped, tag = 'scoped memory for tpu_custom_call.1']
    #allocation8 [shape = 'u8[8192]{0}', space=vmem, size = 0x2000, scoped, tag = 'input window, operand 2, single buffered']
    #allocation9 [shape = 'u8[512]{0}', space=smem, size = 0x200, scoped, tag = 'output window, operand 0, single buffered']
    %8 = vsyncpa [#allocation4], 0
    %9 = vsyncpa [#allocation7], 0
    %10 = vsyncpa [#allocation5], 0
    // Predicated region
    $region2: #{tpu_custom_call.1} parent=1 // pred_check
      _
    $region3: #{tpu_custom_call.1} parent=1 // pred_check_branch
      %12 = sbr.rel (0) target = $region5
    $region4: #{tpu_custom_call.1} parent=1 // pred_region
      %s13 = sadd.s32 0, 0
      %p14 = scmp.lt.s32.totalorder %s13, 0
      %s15 = scalar_select %p14, %s13, 0
      %s16 = smul.u32 2, %s15
      %s18 = ssub.s32 256, 256
      %19 = vsyncadd [#allocation4], %s18
      %s20 = smul.addr %s16, 128
      %s21 = scalar_lea.hbm %s0, %s20
      %s22 = sshll.u32 [#allocation3], 4
      %s23 = int_to_ptr.vmem [resolvable:$true] %s22
      %28 = dma.hbm_to_vmem [thread:$0]  %s21, 256, %s23, [#allocation4], 128, 128, 8
    $region5: #{tpu_custom_call.1} parent=1 // pred_fallthru
      _
    // Predicated region
    $region6: #{tpu_custom_call.1} parent=1 // pred_check
      _
    $region7: #{tpu_custom_call.1} parent=1 // pred_check_branch
      %30 = sbr.rel (0) target = $region9
    $region8: #{tpu_custom_call.1} parent=1 // pred_region
      %s31 = sadd.s32 0, 0
      %p32 = scmp.lt.s32.totalorder %s31, 0
      %s33 = scalar_select %p32, %s31, 0
      %s34 = smul.u32 2, %s33
      %s36 = ssub.s32 256, 256
      %37 = vsyncadd [#allocation7], %s36
      %s38 = smul.addr %s34, 128
      %s39 = scalar_lea.hbm %s1, %s38
      %s40 = sshll.u32 [#allocation6], 4
      %s41 = int_to_ptr.vmem [resolvable:$true] %s40
      %46 = dma.hbm_to_vmem [thread:$0]  %s39, 256, %s41, [#allocation7], 128, 128, 8
    $region9: #{tpu_custom_call.1} parent=1 // pred_fallthru
      _
    // Predicated region
    $region10: #{tpu_custom_call.1} parent=1 // pred_check
      _
    $region11: #{tpu_custom_call.1} parent=1 // pred_check_branch
      %48 = sbr.rel (0) target = $region13
    $region12: #{tpu_custom_call.1} parent=1 // pred_region
      %s49 = sadd.s32 0, 0
      %p50 = scmp.lt.s32.totalorder %s49, 0
      %s51 = scalar_select %p50, %s49, 0
      %s52 = smul.u32 2, %s51
      %s54 = ssub.s32 256, 256
      %55 = vsyncadd [#allocation7], %s54
      %s56 = smul.addr %s52, 128
      %s57 = scalar_lea.hbm %s2, %s56
      %s58 = sshll.u32 [#allocation8], 4
      %s59 = int_to_ptr.vmem [resolvable:$true] %s58
      %64 = dma.hbm_to_vmem [thread:$0]  %s57, 256, %s59, [#allocation7], 128, 128, 8
    $region13: #{tpu_custom_call.1} parent=1 // pred_fallthru
      _
    // Predicated region
    $region14: #{tpu_custom_call.1} parent=1 // pred_check
      _
    $region15: #{tpu_custom_call.1} parent=1 // pred_check_branch
      %66 = sbr.rel (0) target = $region17
    $region16: #{tpu_custom_call.1} parent=1 // pred_region
      %67 = dma.done [#allocation4], 256
    $region17: #{tpu_custom_call.1} parent=1 // pred_fallthru
      _
    // Predicated region
    $region18: #{tpu_custom_call.1} parent=1 // pred_check
      _
    $region19: #{tpu_custom_call.1} parent=1 // pred_check_branch
      %69 = sbr.rel (0) target = $region21
    $region20: #{tpu_custom_call.1} parent=1 // pred_region
      %70 = dma.done [#allocation7], 256
    $region21: #{tpu_custom_call.1} parent=1 // pred_fallthru
      _
    // Predicated region
    $region22: #{tpu_custom_call.1} parent=1 // pred_check
      _
    $region23: #{tpu_custom_call.1} parent=1 // pred_check_branch
      %72 = sbr.rel (0) target = $region25
    $region24: #{tpu_custom_call.1} parent=1 // pred_region
      %73 = dma.done [#allocation7], 256
    $region25: #{tpu_custom_call.1} parent=1 // pred_fallthru
      _
    %s74 = sadd.s32 0, 0
    %p75 = scmp.lt.s32.totalorder %s74, 0
    %s76 = scalar_select %p75, %s74, 0
    %s77 = smul.u32 2, %s76
    %s78 = sadd.s32 0, 0
    %p79 = scmp.lt.s32.totalorder %s78, 0
    %s80 = scalar_select %p79, %s78, 0
    %s81 = smul.u32 2, %s80
    %s82 = sadd.s32 0, 0
    %p83 = scmp.lt.s32.totalorder %s82, 0
    %s84 = scalar_select %p83, %s82, 0
    %s85 = smul.u32 2, %s84
    %p86 = scmp.eq.s32.totalorder 0, 0
    // Predicated region
    $region26: #{tpu_custom_call.1} parent=1 // pred_check
      %p87 = pneg %p86
    $region27: #{tpu_custom_call.1} parent=1 // pred_check_branch
      %89 = sbr.rel (%p87) target = $region29
    $region28: #{tpu_custom_call.1} parent=1 // pred_region
      %vm90 = vcmask 261120
      %91 = vst.msk [vmem:[#allocation2] sm:$0xff] %vm90, 0.0
    $region29: #{tpu_custom_call.1} parent=1 // pred_fallthru
      _
    %s92 = sadd.s32 0, 0
    %s93 = smul.u32 %s92, 16
    %p94 = scmp.lt.s32.totalorder %s93, 16
    // Predicated region
    $region30: #{tpu_custom_call.1} parent=1 // pred_check
      %p95 = pneg %p94
    $region31: #{tpu_custom_call.1} parent=1 // pred_check_branch
      %97 = sbr.rel (%p95) target = $region33
    $region32: #{tpu_custom_call.1} parent=1 // pred_region
      %v98 = vld [vmem:[#allocation3] sm:$0xff]
      %v99 = vld [vmem:[#allocation3 + $0x8] sm:$0xff]
      %v100 = vld [vmem:[#allocation6] sm:$0xff]
      %v101 = vld [vmem:[#allocation6 + $0x8] sm:$0xff]
      %v102 = vld [vmem:[#allocation8] sm:$0xff]
      %v103 = vld [vmem:[#allocation8 + $0x8] sm:$0xff]
      %v104 = vmax.f32 %v98, 0.0
      %v105 = vmax.f32 %v99, 0.0
      %v106 = vmul.f32 %v98, %v100
      %v107 = vmul.f32 %v99, %v101
      %v108 = vsub.f32 %v104, %v106
      %v109 = vsub.f32 %v105, %v107
      %v110 = vand.u32 2147483647, %v98
      %v111 = vand.u32 2147483647, %v99
      %v112 = vsub.f32 0.0, %v110
      %v113 = vsub.f32 0.0, %v111
      %v114 = vmul.f32 %v112, 1.442695
      %v115 = vpow.pop %v114
      %v116 = vmul.f32 %v113, 1.442695
      %v117 = vpow.pop %v116
      %v118 = vadd.f32 %v115, 1.0
      %v119 = vlog2.pop %v118
      %v120 = vmul.f32 %v119, 0.6931472
      %v121 = vmul.f32 -0.5, %v115
      %v122 = vadd.f32 %v121, 1.0
      %v123 = vmul.f32 %v122, %v115
      %v124 = vand.u32 2147483647, %v115
      %vm125 = vcmp.lt.f32.partialorder %v124, 0.0004427343
      %v126 = vsel %vm125, %v123, %v120
      %v127 = vadd.f32 %v117, 1.0
      %v128 = vlog2.pop %v127
      %v129 = vmul.f32 %v128, 0.6931472
      %v130 = vmul.f32 -0.5, %v117
      %v131 = vadd.f32 %v130, 1.0
      %v132 = vmul.f32 %v131, %v117
      %v133 = vand.u32 2147483647, %v117
      %vm134 = vcmp.lt.f32.partialorder %v133, 0.0004427343
      %v135 = vsel %vm134, %v132, %v129
      %v136 = vadd.f32 %v108, %v126
      %v137 = vadd.f32 %v109, %v135
      %139 = vset.pattern.permute.xlu0 0
      %140 = vperm.xlu0 %139, %v102
      %v141 = vpop.permute.xlu0 %140
      %144 = vset.pattern.permute.xlu0 0
      %145 = vperm.xlu0 %144, %v103
      %v146 = vpop.permute.xlu0 %145
      %v148 = vmul.f32 %v136, %v141
      %v149 = vmul.f32 %v137, %v146
      %s150 = sadd.s32 %s93, 16
      %p151 = scmp.le.s32.totalorder %s150, 16
      // Predicated region
      $region34: #{tpu_custom_call.1} parent=32 // pred_check
        %p152 = pneg %p151
      $region35: #{tpu_custom_call.1} parent=32 // pred_check_branch
        %154 = sbr.rel (%p152) target = $region37
      $region36: #{tpu_custom_call.1} parent=32 // pred_region
        %v155 = vld [vmem:[#allocation2] sm:$0xff]
        %vm156 = vcmask 261120
        %v157 = vsel %vm156, %v148, 0.0
        %v158 = vsel %vm156, %v149, 0.0
        %v159 = vadd.f32 %v157, %v158
        %v160 = vadd.f32 %v155, %v159
        %161 = vst.msk [vmem:[#allocation2] sm:$0xff] %vm156, %v160
      $region37: #{tpu_custom_call.1} parent=32 // pred_fallthru
        _
      %p162 = scmp.gt.s32.totalorder %s150, 16
      // Predicated region
      $region38: #{tpu_custom_call.1} parent=32 // pred_check
        %p163 = pneg %p162
      $region39: #{tpu_custom_call.1} parent=32 // pred_check_branch
        %165 = sbr.rel (%p163) target = $region41
      $region40: #{tpu_custom_call.1} parent=32 // pred_region
        %v166 = vlaneseq
        %v167 = vshrl.u32 %v166, 7
        %v168 = vadd.s32 %v167, 8
        %v169 = vstv %s93
        %v170 = vadd.s32 %v169, %v167
        %v171 = vadd.s32 %v169, %v168
        %vm172 = vcmp.lt.s32.totalorder %v170, 16
        %vm173 = vcmp.lt.s32.totalorder %v171, 16
        %v174 = vsel %vm172, 1, 0
        %v175 = vsel %vm173, 1, 0
        %vm176 = vcmp.eq.s32.totalorder %v174, 1
        %vm177 = vcmp.eq.s32.totalorder %v175, 1
        %v178 = vsel %vm176, %v148, 0.0
        %v179 = vsel %vm177, %v149, 0.0
        %v180 = vld [vmem:[#allocation2] sm:$0xff]
        %vm181 = vcmask 261120
        %v182 = vsel %vm181, %v178, 0.0
        %v183 = vsel %vm181, %v179, 0.0
        %v184 = vadd.f32 %v182, %v183
        %v185 = vadd.f32 %v180, %v184
        %186 = vst.msk [vmem:[#allocation2] sm:$0xff] %vm181, %v185
      $region41: #{tpu_custom_call.1} parent=32 // pred_fallthru
        _
    $region33: #{tpu_custom_call.1} parent=1 // pred_fallthru
      _
    // Predicated region
    $region42: #{tpu_custom_call.1} parent=1 // pred_check
      %p187 = pneg %p86
    $region43: #{tpu_custom_call.1} parent=1 // pred_check_branch
      %189 = sbr.rel (%p187) target = $region45
    $region44: #{tpu_custom_call.1} parent=1 // pred_region
      %v190 = vld [vmem:[#allocation2] sm:$0xff]
      %vm191 = vcmask 261120
      %v192 = vsel %vm191, %v190, 0.0
      %193 = vadd.xlane.f32.xlu0 %v192
      %v194 = vpop.xlane.xlu0 %193
      %v195 = vrot.slane %v194, 4
      %v196 = vadd.f32 %v194, %v195
      %v197 = vrot.slane %v196, 2
      %v198 = vadd.f32 %v196, %v197
      %v199 = vrot.slane %v198, 1
      %v200 = vadd.f32 %v198, %v199
      %s201 = vtos %v200
      %s202 = scalar_lea.smem [#allocation9], 0
      %203 = sst [smem:[%s202]] %s201
    $region45: #{tpu_custom_call.1} parent=1 // pred_fallthru
      _
    // Predicated region
    $region46: #{tpu_custom_call.1} parent=1 // pred_check
      _
    $region47: #{tpu_custom_call.1} parent=1 // pred_check_branch
      %205 = sbr.rel (0) target = $region49
    $region48: #{tpu_custom_call.1} parent=1 // pred_region
      %s207 = ssub.s32 16, 16
      %208 = vsyncadd [#allocation5], %s207
      %211 = dma.smem_to_hbm [#allocation9], 16, %s3, [#allocation5]
    $region49: #{tpu_custom_call.1} parent=1 // pred_fallthru
      _
    // Predicated region
    $region50: #{tpu_custom_call.1} parent=1 // pred_check
      _
    $region51: #{tpu_custom_call.1} parent=1 // pred_check_branch
      %213 = sbr.rel (0) target = $region53
    $region52: #{tpu_custom_call.1} parent=1 // pred_region
      %214 = dma.done [#allocation5], 16
    $region53: #{tpu_custom_call.1} parent=1 // pred_fallthru
      _
    %215 = sfence
    %216 = vsyncpa [#allocation4], 1
    %217 = vsyncpa [#allocation7], 1
    %218 = vsyncpa [#allocation5], 1

</llo_original>
